<compile_context>
chip_gen: v6e
topology: v6e:2x2x1
jax: 0.10.0
libtpu: 0.0.40
codegen_flags: <defaults>
</compile_context>

<pallas_src>
import jax
import jax.numpy as jnp
from jax.experimental import pallas as pl
from jax.experimental.pallas import tpu as pltpu

BN_EPS = 1e-5


# ----------------------------- fused kernel -------------------------------- #
def make_fused_kernel(layer_sizes):
    """Kernel computing the whole NF forward pass in one body (no grid).

    Refs:
      x_ref : (B, layer_sizes[0])                f32
      w_ref : (n_layers, max_in, max_out)        f32, layer i weight in
              w_ref[i, :fan_in, :fan_out], already (in, out) laid out.
      v_ref : (n_layers, 3, max_out)             f32, rows = [bias, gamma, beta]
      o_ref : (B, layer_sizes[-1])
    """
    n_layers = len(layer_sizes) - 1

    def kernel(x_ref, w_ref, v_ref, o_ref):
        x = x_ref[...].astype(jnp.float32)                      # (B, in0)
        for i in range(n_layers):
            fan_in = layer_sizes[i]
            fan_out = layer_sizes[i + 1]
            w = w_ref[i, :fan_in, :fan_out]                     # (in, out), static slice
            b = v_ref[i, 0:1, :fan_out]                         # (1, out)
            h = jnp.dot(x, w, preferred_element_type=jnp.float32) + b
            if i == n_layers - 1:
                x = jax.nn.sigmoid(h)
            else:
                gamma = v_ref[i, 1:2, :fan_out]                 # (1, out)
                beta = v_ref[i, 2:3, :fan_out]                  # (1, out)
                r = jnp.maximum(h, 0.0)                         # ReLU
                # One-pass batch statistics (train-mode BN, biased variance),
                # clamped so cancellation can never drive var negative.
                mean = jnp.mean(r, axis=0, keepdims=True)       # (1, out)
                ex2 = jnp.mean(r * r, axis=0, keepdims=True)    # (1, out)
                var = jnp.maximum(ex2 - mean * mean, 0.0)
                inv = jax.lax.rsqrt(var + BN_EPS)               # (1, out), EUP
                scale = gamma * inv                             # (1, out)
                shift = beta - mean * scale                     # (1, out)
                x = r * scale + shift                           # 2 broadcast passes
        o_ref[...] = x.astype(o_ref.dtype)

    return kernel


# ----------------------------- parameter packing ---------------------------- #
def pack_params(layer_sizes, params):
    """One-time packing: transpose weights to (in, out) and pad into two buffers."""
    n_layers = len(layer_sizes) - 1
    max_in = max(layer_sizes[:-1])
    max_out = max(layer_sizes[1:])
    w_buf = jnp.zeros((n_layers, max_in, max_out), jnp.float32)
    v_buf = jnp.zeros((n_layers, 3, max_out), jnp.float32)
    for i, p in enumerate(params):
        fan_in, fan_out = layer_sizes[i], layer_sizes[i + 1]
        w_buf = w_buf.at[i, :fan_in, :fan_out].set(p["w"].T)    # torch (out,in) -> (in,out)
        v_buf = v_buf.at[i, 0, :fan_out].set(p["b"][0])
        if i != n_layers - 1:
            v_buf = v_buf.at[i, 1, :fan_out].set(p["gamma"][0])
            v_buf = v_buf.at[i, 2, :fan_out].set(p["beta"][0])
    return w_buf, v_buf


# ----------------------------- wrapper -------------------------------------- #
def nf_forward(w_packed, v_packed, x, layer_sizes):
    """Single fused pallas_call (no grid, everything VMEM-resident)."""
    B = x.shape[0]
    out_features = layer_sizes[-1]
    vmem = pltpu.MemorySpace.VMEM
    return pl.pallas_call(
        make_fused_kernel(layer_sizes),
        out_shape=jax.ShapeDtypeStruct((B, out_features), x.dtype),
        in_specs=[pl.BlockSpec(memory_space=vmem),
                  pl.BlockSpec(memory_space=vmem),
                  pl.BlockSpec(memory_space=vmem)],
        out_specs=pl.BlockSpec(memory_space=vmem),
    )(x, w_packed, v_packed)


# ----------------------------- NF params ------------------------------------ #
def init_nf_params(layer_sizes, key):
    """Deterministic init mirroring the shapes of nn.Linear / nn.BatchNorm1d."""
    params = []
    n_layers = len(layer_sizes) - 1
    for i in range(n_layers):
        fan_in, fan_out = layer_sizes[i], layer_sizes[i + 1]
        key, kw, kb = jax.random.split(key, 3)
        bound = 1.0 / jnp.sqrt(jnp.float32(fan_in))
        w = jax.random.uniform(kw, (fan_out, fan_in), jnp.float32, -bound, bound)
        b = jax.random.uniform(kb, (1, fan_out), jnp.float32, -bound, bound)
        if i == n_layers - 1:
            params.append({"w": w, "b": b})
        else:
            params.append({"w": w, "b": b,
                           "gamma": jnp.ones((1, fan_out), jnp.float32),
                           "beta": jnp.zeros((1, fan_out), jnp.float32)})
    return params


# ----------------------------- reference (plain JAX) ------------------------ #
def nf_forward_ref(params, x):
    n_layers = len(params)
    for i, p in enumerate(params):
        h = x @ p["w"].T + p["b"]
        if i == n_layers - 1:
            x = jax.nn.sigmoid(h)
        else:
            r = jnp.maximum(h, 0.0)
            mean = jnp.mean(r, axis=0, keepdims=True)
            var = jnp.mean((r - mean) ** 2, axis=0, keepdims=True)
            x = p["gamma"] * (r - mean) * jax.lax.rsqrt(var + BN_EPS) + p["beta"]
    return x


# ----------------------------- main ----------------------------------------- #
if __name__ == "__main__":
    layer_sizes = [32, 64, 48, 16]   # Linear+ReLU+BN, Linear+ReLU+BN, Linear+Sigmoid
    batch = 8

    key = jax.random.PRNGKey(0)
    kx, kp = jax.random.split(key)
    x = jax.random.normal(kx, (batch, layer_sizes[0]), jnp.float32)
    params = init_nf_params(layer_sizes, kp)

    # One-time packing (weights pre-transposed here, NOT per forward call).
    w_packed, v_packed = pack_params(layer_sizes, params)
    w_packed = jax.block_until_ready(w_packed)
    v_packed = jax.block_until_ready(v_packed)

    out = nf_forward(w_packed, v_packed, x, layer_sizes)
    out = jax.block_until_ready(out)

    ref = nf_forward_ref(params, x)
    assert out.shape == (batch, layer_sizes[-1])
    assert jnp.allclose(out, ref, atol=1e-4, rtol=1e-4), "mismatch vs JAX reference"

    print("KERNEL_OK")
</pallas_src>

<mosaic_0001>
module attributes {stable_mosaic.version = 11 : i64} {
  func.func @kernel(%arg0: memref<8x32xf32, #tpu.memory_space<vmem>>, %arg1: memref<3x64x64xf32, #tpu.memory_space<vmem>>, %arg2: memref<3x3x64xf32, #tpu.memory_space<vmem>>, %arg3: memref<8x16xf32, #tpu.memory_space<vmem>>) attributes {dimension_semantics = [], scalar_prefetch = 0 : i64, scratch_operands = 0 : i64, tpu.core_type = #tpu.core_type<tc>} {
    %c0 = arith.constant 0 : index
    %c0_0 = arith.constant 0 : index
    %0 = vector.load %arg0[%c0, %c0_0] : memref<8x32xf32, #tpu.memory_space<vmem>>, vector<8x32xf32>
    %c0_1 = arith.constant 0 : index
    %c0_2 = arith.constant 0 : index
    %c0_3 = arith.constant 0 : index
    %1 = vector.load %arg1[%c0_1, %c0_2, %c0_3] : memref<3x64x64xf32, #tpu.memory_space<vmem>>, vector<1x32x64xf32>
    %2 = vector.shape_cast %1 : vector<1x32x64xf32> to vector<32x64xf32>
    %c0_4 = arith.constant 0 : index
    %c0_5 = arith.constant 0 : index
    %c0_6 = arith.constant 0 : index
    %3 = vector.load %arg2[%c0_4, %c0_5, %c0_6] : memref<3x3x64xf32, #tpu.memory_space<vmem>>, vector<1x1x64xf32>
    %4 = vector.shape_cast %3 : vector<1x1x64xf32> to vector<1x64xf32>
    %cst = arith.constant dense<0.000000e+00> : vector<8x64xf32>
    %5 = tpu.matmul %0, %2, %cst {dimension_numbers = #tpu.dot_dimension_numbers<[1], [0], [0], [1], [0, 0, 1, 1], [], []>} : vector<8x32xf32>, vector<32x64xf32>, vector<8x64xf32> -> vector<8x64xf32>
    %6 = vector.broadcast %4 : vector<1x64xf32> to vector<8x64xf32>
    %7 = arith.addf %5, %6 : vector<8x64xf32>
    %c0_7 = arith.constant 0 : index
    %c1 = arith.constant 1 : index
    %c0_8 = arith.constant 0 : index
    %8 = vector.load %arg2[%c0_7, %c1, %c0_8] : memref<3x3x64xf32, #tpu.memory_space<vmem>>, vector<1x1x64xf32>
    %9 = vector.shape_cast %8 : vector<1x1x64xf32> to vector<1x64xf32>
    %c0_9 = arith.constant 0 : index
    %c2 = arith.constant 2 : index
    %c0_10 = arith.constant 0 : index
    %10 = vector.load %arg2[%c0_9, %c2, %c0_10] : memref<3x3x64xf32, #tpu.memory_space<vmem>>, vector<1x1x64xf32>
    %11 = vector.shape_cast %10 : vector<1x1x64xf32> to vector<1x64xf32>
    %cst_11 = arith.constant 0.000000e+00 : f32
    %12 = vector.broadcast %cst_11 : f32 to vector<8x64xf32>
    %13 = arith.maximumf %7, %12 : vector<8x64xf32>
    %cst_12 = arith.constant dense<0.000000e+00> : vector<64xf32>
    %14 = vector.multi_reduction <add>, %13, %cst_12 [0] : vector<8x64xf32> to vector<64xf32>
    %15 = vector.shape_cast %14 : vector<64xf32> to vector<1x64xf32>
    %cst_13 = arith.constant 8.000000e+00 : f32
    %16 = vector.broadcast %cst_13 : f32 to vector<1x64xf32>
    %17 = arith.divf %15, %16 : vector<1x64xf32>
    %18 = arith.mulf %13, %13 : vector<8x64xf32>
    %cst_14 = arith.constant dense<0.000000e+00> : vector<64xf32>
    %19 = vector.multi_reduction <add>, %18, %cst_14 [0] : vector<8x64xf32> to vector<64xf32>
    %20 = vector.shape_cast %19 : vector<64xf32> to vector<1x64xf32>
    %cst_15 = arith.constant 8.000000e+00 : f32
    %21 = vector.broadcast %cst_15 : f32 to vector<1x64xf32>
    %22 = arith.divf %20, %21 : vector<1x64xf32>
    %23 = arith.mulf %17, %17 : vector<1x64xf32>
    %24 = arith.subf %22, %23 : vector<1x64xf32>
    %cst_16 = arith.constant 0.000000e+00 : f32
    %25 = vector.broadcast %cst_16 : f32 to vector<1x64xf32>
    %26 = arith.maximumf %24, %25 : vector<1x64xf32>
    %cst_17 = arith.constant 9.99999974E-6 : f32
    %27 = vector.broadcast %cst_17 : f32 to vector<1x64xf32>
    %28 = arith.addf %26, %27 : vector<1x64xf32>
    %29 = math.rsqrt %28 : vector<1x64xf32>
    %30 = arith.mulf %9, %29 : vector<1x64xf32>
    %31 = arith.mulf %17, %30 : vector<1x64xf32>
    %32 = arith.subf %11, %31 : vector<1x64xf32>
    %33 = vector.broadcast %30 : vector<1x64xf32> to vector<8x64xf32>
    %34 = arith.mulf %13, %33 : vector<8x64xf32>
    %35 = vector.broadcast %32 : vector<1x64xf32> to vector<8x64xf32>
    %36 = arith.addf %34, %35 : vector<8x64xf32>
    %c1_18 = arith.constant 1 : index
    %c0_19 = arith.constant 0 : index
    %c0_20 = arith.constant 0 : index
    %37 = vector.load %arg1[%c1_18, %c0_19, %c0_20] : memref<3x64x64xf32, #tpu.memory_space<vmem>>, vector<1x64x48xf32>
    %38 = vector.shape_cast %37 : vector<1x64x48xf32> to vector<64x48xf32>
    %c1_21 = arith.constant 1 : index
    %c0_22 = arith.constant 0 : index
    %c0_23 = arith.constant 0 : index
    %39 = vector.load %arg2[%c1_21, %c0_22, %c0_23] : memref<3x3x64xf32, #tpu.memory_space<vmem>>, vector<1x1x48xf32>
    %40 = vector.shape_cast %39 : vector<1x1x48xf32> to vector<1x48xf32>
    %cst_24 = arith.constant dense<0.000000e+00> : vector<8x48xf32>
    %41 = tpu.matmul %36, %38, %cst_24 {dimension_numbers = #tpu.dot_dimension_numbers<[1], [0], [0], [1], [0, 0, 1, 1], [], []>} : vector<8x64xf32>, vector<64x48xf32>, vector<8x48xf32> -> vector<8x48xf32>
    %42 = vector.broadcast %40 : vector<1x48xf32> to vector<8x48xf32>
    %43 = arith.addf %41, %42 : vector<8x48xf32>
    %c1_25 = arith.constant 1 : index
    %c1_26 = arith.constant 1 : index
    %c0_27 = arith.constant 0 : index
    %44 = vector.load %arg2[%c1_25, %c1_26, %c0_27] : memref<3x3x64xf32, #tpu.memory_space<vmem>>, vector<1x1x48xf32>
    %45 = vector.shape_cast %44 : vector<1x1x48xf32> to vector<1x48xf32>
    %c1_28 = arith.constant 1 : index
    %c2_29 = arith.constant 2 : index
    %c0_30 = arith.constant 0 : index
    %46 = vector.load %arg2[%c1_28, %c2_29, %c0_30] : memref<3x3x64xf32, #tpu.memory_space<vmem>>, vector<1x1x48xf32>
    %47 = vector.shape_cast %46 : vector<1x1x48xf32> to vector<1x48xf32>
    %cst_31 = arith.constant 0.000000e+00 : f32
    %48 = vector.broadcast %cst_31 : f32 to vector<8x48xf32>
    %49 = arith.maximumf %43, %48 : vector<8x48xf32>
    %cst_32 = arith.constant dense<0.000000e+00> : vector<48xf32>
    %50 = vector.multi_reduction <add>, %49, %cst_32 [0] : vector<8x48xf32> to vector<48xf32>
    %51 = vector.shape_cast %50 : vector<48xf32> to vector<1x48xf32>
    %cst_33 = arith.constant 8.000000e+00 : f32
    %52 = vector.broadcast %cst_33 : f32 to vector<1x48xf32>
    %53 = arith.divf %51, %52 : vector<1x48xf32>
    %54 = arith.mulf %49, %49 : vector<8x48xf32>
    %cst_34 = arith.constant dense<0.000000e+00> : vector<48xf32>
    %55 = vector.multi_reduction <add>, %54, %cst_34 [0] : vector<8x48xf32> to vector<48xf32>
    %56 = vector.shape_cast %55 : vector<48xf32> to vector<1x48xf32>
    %cst_35 = arith.constant 8.000000e+00 : f32
    %57 = vector.broadcast %cst_35 : f32 to vector<1x48xf32>
    %58 = arith.divf %56, %57 : vector<1x48xf32>
    %59 = arith.mulf %53, %53 : vector<1x48xf32>
    %60 = arith.subf %58, %59 : vector<1x48xf32>
    %cst_36 = arith.constant 0.000000e+00 : f32
    %61 = vector.broadcast %cst_36 : f32 to vector<1x48xf32>
    %62 = arith.maximumf %60, %61 : vector<1x48xf32>
    %cst_37 = arith.constant 9.99999974E-6 : f32
    %63 = vector.broadcast %cst_37 : f32 to vector<1x48xf32>
    %64 = arith.addf %62, %63 : vector<1x48xf32>
    %65 = math.rsqrt %64 : vector<1x48xf32>
    %66 = arith.mulf %45, %65 : vector<1x48xf32>
    %67 = arith.mulf %53, %66 : vector<1x48xf32>
    %68 = arith.subf %47, %67 : vector<1x48xf32>
    %69 = vector.broadcast %66 : vector<1x48xf32> to vector<8x48xf32>
    %70 = arith.mulf %49, %69 : vector<8x48xf32>
    %71 = vector.broadcast %68 : vector<1x48xf32> to vector<8x48xf32>
    %72 = arith.addf %70, %71 : vector<8x48xf32>
    %c2_38 = arith.constant 2 : index
    %c0_39 = arith.constant 0 : index
    %c0_40 = arith.constant 0 : index
    %73 = vector.load %arg1[%c2_38, %c0_39, %c0_40] : memref<3x64x64xf32, #tpu.memory_space<vmem>>, vector<1x48x16xf32>
    %74 = vector.shape_cast %73 : vector<1x48x16xf32> to vector<48x16xf32>
    %c2_41 = arith.constant 2 : index
    %c0_42 = arith.constant 0 : index
    %c0_43 = arith.constant 0 : index
    %75 = vector.load %arg2[%c2_41, %c0_42, %c0_43] : memref<3x3x64xf32, #tpu.memory_space<vmem>>, vector<1x1x16xf32>
    %76 = vector.shape_cast %75 : vector<1x1x16xf32> to vector<1x16xf32>
    %cst_44 = arith.constant dense<0.000000e+00> : vector<8x16xf32>
    %77 = tpu.matmul %72, %74, %cst_44 {dimension_numbers = #tpu.dot_dimension_numbers<[1], [0], [0], [1], [0, 0, 1, 1], [], []>} : vector<8x48xf32>, vector<48x16xf32>, vector<8x16xf32> -> vector<8x16xf32>
    %78 = vector.broadcast %76 : vector<1x16xf32> to vector<8x16xf32>
    %79 = arith.addf %77, %78 : vector<8x16xf32>
    %80 = arith.negf %79 : vector<8x16xf32>
    %81 = math.exp %80 : vector<8x16xf32>
    %cst_45 = arith.constant 1.000000e+00 : f32
    %82 = vector.broadcast %cst_45 : f32 to vector<8x16xf32>
    %83 = arith.addf %82, %81 : vector<8x16xf32>
    %84 = arith.divf %82, %83 : vector<8x16xf32>
    %c0_46 = arith.constant 0 : index
    %c0_47 = arith.constant 0 : index
    %85 = vector.load %arg3[%c0_46, %c0_47] : memref<8x16xf32, #tpu.memory_space<vmem>>, vector<8x16xf32>
    tpu.vector_store %arg3[%c0_46, %c0_47], %84 {strides = array<i32>} : memref<8x16xf32, #tpu.memory_space<vmem>>, vector<8x16xf32>,
    return
  }
}

</mosaic_0001>

<llo_original>
// kernel: tpu_custom_call.1
$region0: #{tpu_custom_call.1}
  #allocation0 [shape = 'u32[]', space=smem, size = 0x4, offset = 0x4, fixed_abs, tag = 'smem constant byte address 0x4 - core index']
  #allocation1 [shape = 'u32[144,128]{1,0:T(1,128)}', space=vmem, size = 0x12000, scoped, tag = 'internal scratch']
  %s0 = inlined_call_operand.hbm [shape: f32[8,32], index: 0, kind: input, shape index: {}]
  %s1 = inlined_call_operand.hbm [shape: f32[3,64,64], index: 1, kind: input, shape index: {}]
  %s2 = inlined_call_operand.hbm [shape: f32[3,3,64], index: 2, kind: input, shape index: {}]
  %s3 = inlined_call_operand.hbm [shape: f32[8,16], index: 3, kind: output, shape index: {}]
  %s4 = sld [smem:[#allocation0]]
  $region34: #{tpu_custom_call.1} parent=0
    _
  %s6 = ssub.s32 1, %s4
  %s7 = scalar_select 0, %s6, %s4
  $region1: #{tpu_custom_call.1} parent=0
    #allocation2 [shape = 'u8[4096]{0}', space=vmem, size = 0x1000, scoped, tag = 'input window, operand 0, single buffered']
    #allocation3 [shape = 's32[1]{0}', space=sflag, size = 0x4, scoped, tag = 'scoped memory for tpu_custom_call.1']
    #allocation4 [shape = 's32[1]{0}', space=sflag, size = 0x4, scoped, tag = 'scoped memory for tpu_custom_call.1']
    #allocation5 [shape = 'u8[98304]{0}', space=vmem, size = 0x18000, scoped, tag = 'input window, operand 1, single buffered']
    #allocation6 [shape = 's32[1]{0}', space=sflag, size = 0x4, scoped, tag = 'scoped memory for tpu_custom_call.1']
    #allocation7 [shape = 'u8[6144]{0}', space=vmem, size = 0x1800, scoped, tag = 'input window, operand 2, single buffered']
    #allocation8 [shape = 'u8[4096]{0}', space=vmem, size = 0x1000, scoped, tag = 'output window, operand 0, single buffered']
    %8 = vsyncpa [#allocation3], 0
    %9 = vsyncpa [#allocation6], 0
    %10 = vsyncpa [#allocation4], 0
    // Predicated region
    $region2: #{tpu_custom_call.1} parent=1 // pred_check
      _
    $region3: #{tpu_custom_call.1} parent=1 // pred_check_branch
      %12 = sbr.rel (0) target = $region5
    $region4: #{tpu_custom_call.1} parent=1 // pred_region
      %s14 = ssub.s32 128, 128
      %15 = vsyncadd [#allocation3], %s14
      %s17 = sshll.u32 [#allocation2], 4
      %s18 = int_to_ptr.vmem [resolvable:$true] %s17
      %20 = dma.hbm_to_vmem [thread:$0]  %s0, 128, %s18, [#allocation3]
    $region5: #{tpu_custom_call.1} parent=1 // pred_fallthru
      _
    // Predicated region
    $region6: #{tpu_custom_call.1} parent=1 // pred_check
      _
    $region7: #{tpu_custom_call.1} parent=1 // pred_check_branch
      %22 = sbr.rel (0) target = $region9
    $region8: #{tpu_custom_call.1} parent=1 // pred_region
      %s24 = ssub.s32 3072, 3072
      %25 = vsyncadd [#allocation6], %s24
      %s26 = sshll.u32 [#allocation5], 4
      %s27 = int_to_ptr.vmem [resolvable:$true] %s26
      %32 = dma.hbm_to_vmem [thread:$0]  %s1, 3072, %s27, [#allocation6], 128, 128, 8
    $region9: #{tpu_custom_call.1} parent=1 // pred_fallthru
      _
    // Predicated region
    $region10: #{tpu_custom_call.1} parent=1 // pred_check
      _
    $region11: #{tpu_custom_call.1} parent=1 // pred_check_branch
      %34 = sbr.rel (0) target = $region13
    $region12: #{tpu_custom_call.1} parent=1 // pred_region
      %s36 = ssub.s32 192, 192
      %37 = vsyncadd [#allocation6], %s36
      %s38 = sshll.u32 [#allocation7], 4
      %s39 = int_to_ptr.vmem [resolvable:$true] %s38
      %44 = dma.hbm_to_vmem [thread:$0]  %s2, 192, %s39, [#allocation6], 64, 64, 4
    $region13: #{tpu_custom_call.1} parent=1 // pred_fallthru
      _
    // Predicated region
    $region14: #{tpu_custom_call.1} parent=1 // pred_check
      _
    $region15: #{tpu_custom_call.1} parent=1 // pred_check_branch
      %46 = sbr.rel (0) target = $region17
    $region16: #{tpu_custom_call.1} parent=1 // pred_region
      %47 = dma.done [#allocation3], 128
    $region17: #{tpu_custom_call.1} parent=1 // pred_fallthru
      _
    // Predicated region
    $region18: #{tpu_custom_call.1} parent=1 // pred_check
      _
    $region19: #{tpu_custom_call.1} parent=1 // pred_check_branch
      %49 = sbr.rel (0) target = $region21
    $region20: #{tpu_custom_call.1} parent=1 // pred_region
      %50 = dma.done [#allocation6], 3072
    $region21: #{tpu_custom_call.1} parent=1 // pred_fallthru
      _
    // Predicated region
    $region22: #{tpu_custom_call.1} parent=1 // pred_check
      _
    $region23: #{tpu_custom_call.1} parent=1 // pred_check_branch
      %52 = sbr.rel (0) target = $region25
    $region24: #{tpu_custom_call.1} parent=1 // pred_region
      %53 = dma.done [#allocation6], 192
    $region25: #{tpu_custom_call.1} parent=1 // pred_fallthru
      _
    %v54 = vld [vmem:[#allocation2] sm:$0xff]
    %v55 = vld [vmem:[#allocation5] sm:$0xff]
    %v56 = vld [vmem:[#allocation5 + $0x8] sm:$0xff]
    %v57 = vld [vmem:[#allocation5 + $0x10] sm:$0xff]
    %v58 = vld [vmem:[#allocation5 + $0x18] sm:$0xff]
    %v59 = vld [vmem:[#allocation7] sm:$0x1]
    %v60 = vlaneseq
    %v61 = vshrl.u32 %v60, 7
    %v62 = vsub.s32 0, %v61
    %v63 = vrot.slane %v59, %v62
    %vm64 = vcmask 261120
    %v66 = vsel %vm64, %v54, 0
    %68 = vmatprep.subr.mxu0 0.0
    %69 = vmatpush1.msra.mxu0 0.0
    %70 = vmatprep.subr.mxu0 0.0
    %71 = vmatpush1.msra.mxu0 0.0
    %72 = vmatprep.subr.mxu0 0.0
    %73 = vmatpush1.msra.mxu0 0.0
    %74 = vmatprep.subr.mxu0 0.0
    %75 = vmatpush1.msra.mxu0 0.0
    %76 = vmatprep.subr.mxu0 0.0
    %77 = vmatpush1.msra.mxu0 0.0
    %78 = vmatprep.subr.mxu0 0.0
    %79 = vmatpush1.msra.mxu0 0.0
    %80 = vmatprep.subr.mxu0 0.0
    %81 = vmatpush1.msra.mxu0 0.0
    %82 = vmatprep.subr.mxu0 0.0
    %83 = vmatpush1.msra.mxu0 0.0
    %84 = vmatprep.subr.mxu0 0.0
    %85 = vmatpush1.msra.mxu0 0.0
    %86 = vmatprep.subr.mxu0 0.0
    %87 = vmatpush1.msra.mxu0 0.0
    %88 = vmatprep.subr.mxu0 0.0
    %89 = vmatpush1.msra.mxu0 0.0
    %90 = vmatprep.subr.mxu0 0.0
    %91 = vmatpush1.msra.mxu0 0.0
    %92 = vmatprep.subr.mxu0 0.0
    %93 = vmatpush1.msra.mxu0 %v58
    %94 = vmatprep.subr.mxu0 0.0
    %95 = vmatpush1.msra.mxu0 %v57
    %96 = vmatprep.subr.mxu0 0.0
    %97 = vmatpush1.msra.mxu0 %v56
    %98 = vmatprep.subr.mxu0 0.0
    %99 = vmatpush1.msra.mxu0 %v55
    %100 = vmatprep.subr.mxu0 0.0
    %101 = vmatpush2.msra.mxu0 0.0
    %102 = vmatprep.subr.mxu0 0.0
    %103 = vmatpush2.msra.mxu0 0.0
    %104 = vmatprep.subr.mxu0 0.0
    %105 = vmatpush2.msra.mxu0 0.0
    %106 = vmatprep.subr.mxu0 0.0
    %107 = vmatpush2.msra.mxu0 0.0
    %108 = vmatprep.subr.mxu0 0.0
    %109 = vmatpush2.msra.mxu0 0.0
    %110 = vmatprep.subr.mxu0 0.0
    %111 = vmatpush2.msra.mxu0 0.0
    %112 = vmatprep.subr.mxu0 0.0
    %113 = vmatpush2.msra.mxu0 0.0
    %114 = vmatprep.subr.mxu0 0.0
    %115 = vmatpush2.msra.mxu0 0.0
    %116 = vmatprep.subr.mxu0 0.0
    %117 = vmatpush2.msra.mxu0 0.0
    %118 = vmatprep.subr.mxu0 0.0
    %119 = vmatpush2.msra.mxu0 0.0
    %120 = vmatprep.subr.mxu0 0.0
    %121 = vmatpush2.msra.mxu0 0.0
    %122 = vmatprep.subr.mxu0 0.0
    %123 = vmatpush2.msra.mxu0 0.0
    %124 = vmatprep.subr.mxu0 0.0
    %125 = vmatpush2.msra.mxu0 0.0
    %126 = vmatprep.subr.mxu0 0.0
    %127 = vmatpush2.msra.mxu0 0.0
    %128 = vmatprep.subr.mxu0 0.0
    %129 = vmatpush2.msra.mxu0 0.0
    %130 = vmatprep.subr.mxu0 0.0
    %131 = vmatpush2.msra.mxu0 0.0
    %132 = vmatprep.mubr.f32.mxu0 0.0
    %133 = vmatmul.mubr.f32.gmra.mxu0 %v66
    %v134 = vpop.f32.mrf.mxu0
    %v135 = vadd.f32 %v63, %v134
    %v136 = vpop.f32.mrf.mxu0
    %137 = vdwg.mxu0
    %v138 = vld [vmem:[#allocation7 + $0x1] sm:$0x1]
    %v139 = vld [vmem:[#allocation7 + $0x2] sm:$0x1]
    %v140 = vmax.f32 %v135, 0.0
    %vm141 = vcmask 523264
    %v142 = vsel %vm141, %v140, 0.0
    %v143 = vrot.slane %v142, 4
    %v144 = vadd.f32 %v142, %v143
    %v145 = vrot.slane %v144, 2
    %v146 = vadd.f32 %v144, %v145
    %v147 = vrot.slane %v146, 1
    %v148 = vadd.f32 %v146, %v147
    %v149 = vrcp.pop 8.0
    %v150 = vmul.f32 %v148, %v149
    %v151 = vmul.f32 %v140, %v140
    %v152 = vsel %vm141, %v151, 0.0
    %v153 = vrot.slane %v152, 4
    %v154 = vadd.f32 %v152, %v153
    %v155 = vrot.slane %v154, 2
    %v156 = vadd.f32 %v154, %v155
    %v157 = vrot.slane %v156, 1
    %v158 = vadd.f32 %v156, %v157
    %v159 = vmul.f32 %v158, %v149
    %v160 = vmul.f32 %v150, %v150
    %v161 = vsub.f32 %v159, %v160
    %v162 = vmax.f32 %v161, 0.0
    %v163 = vadd.f32 %v162, 1e-05
    %v164 = vrsqrt.pop %v163
    %v165 = vmul.f32 %v138, %v164
    %v166 = vmul.f32 %v150, %v165
    %v167 = vsub.f32 %v139, %v166
    %v168 = vlaneseq
    %v169 = vshrl.u32 %v168, 7
    %v170 = vsub.s32 0, %v169
    %v171 = vrot.slane %v165, %v170
    %v172 = vmul.f32 %v140, %v171
    %v173 = vlaneseq
    %v174 = vshrl.u32 %v173, 7
    %v175 = vsub.s32 0, %v174
    %v176 = vrot.slane %v167, %v175
    %v177 = vadd.f32 %v172, %v176
    %s178 = scalar_lea.vmem [#allocation5], 64
    %v179 = vld [vmem:[%s178] sm:$0xff]
    %v180 = vld [vmem:[%s178 + $0x8] sm:$0xff]
    %v181 = vld [vmem:[%s178 + $0x10] sm:$0xff]
    %v182 = vld [vmem:[%s178 + $0x18] sm:$0xff]
    %v183 = vld [vmem:[%s178 + $0x20] sm:$0xff]
    %v184 = vld [vmem:[%s178 + $0x28] sm:$0xff]
    %v185 = vld [vmem:[%s178 + $0x30] sm:$0xff]
    %v186 = vld [vmem:[%s178 + $0x38] sm:$0xff]
    %s187 = scalar_lea.vmem [#allocation7], 4
    %v188 = vld [vmem:[%s187] sm:$0x1]
    %v189 = vlaneseq
    %v190 = vshrl.u32 %v189, 7
    %v191 = vsub.s32 0, %v190
    %v192 = vrot.slane %v188, %v191
    %v194 = vsel %vm141, %v177, 0
    %196 = vmatprep.subr.mxu0 0.0
    %197 = vmatpush1.msra.mxu0 0.0
    %198 = vmatprep.subr.mxu0 0.0
    %199 = vmatpush1.msra.mxu0 0.0
    %200 = vmatprep.subr.mxu0 0.0
    %201 = vmatpush1.msra.mxu0 0.0
    %202 = vmatprep.subr.mxu0 0.0
    %203 = vmatpush1.msra.mxu0 0.0
    %204 = vmatprep.subr.mxu0 0.0
    %205 = vmatpush1.msra.mxu0 0.0
    %206 = vmatprep.subr.mxu0 0.0
    %207 = vmatpush1.msra.mxu0 0.0
    %208 = vmatprep.subr.mxu0 0.0
    %209 = vmatpush1.msra.mxu0 0.0
    %210 = vmatprep.subr.mxu0 0.0
    %211 = vmatpush1.msra.mxu0 0.0
    %212 = vmatprep.subr.mxu0 0.0
    %213 = vmatpush1.msra.mxu0 %v186
    %214 = vmatprep.subr.mxu0 0.0
    %215 = vmatpush1.msra.mxu0 %v185
    %216 = vmatprep.subr.mxu0 0.0
    %217 = vmatpush1.msra.mxu0 %v184
    %218 = vmatprep.subr.mxu0 0.0
    %219 = vmatpush1.msra.mxu0 %v183
    %220 = vmatprep.subr.mxu0 0.0
    %221 = vmatpush1.msra.mxu0 %v182
    %222 = vmatprep.subr.mxu0 0.0
    %223 = vmatpush1.msra.mxu0 %v181
    %224 = vmatprep.subr.mxu0 0.0
    %225 = vmatpush1.msra.mxu0 %v180
    %226 = vmatprep.subr.mxu0 0.0
    %227 = vmatpush1.msra.mxu0 %v179
    %228 = vmatprep.subr.mxu0 0.0
    %229 = vmatpush2.msra.mxu0 0.0
    %230 = vmatprep.subr.mxu0 0.0
    %231 = vmatpush2.msra.mxu0 0.0
    %232 = vmatprep.subr.mxu0 0.0
    %233 = vmatpush2.msra.mxu0 0.0
    %234 = vmatprep.subr.mxu0 0.0
    %235 = vmatpush2.msra.mxu0 0.0
    %236 = vmatprep.subr.mxu0 0.0
    %237 = vmatpush2.msra.mxu0 0.0
    %238 = vmatprep.subr.mxu0 0.0
    %239 = vmatpush2.msra.mxu0 0.0
    %240 = vmatprep.subr.mxu0 0.0
    %241 = vmatpush2.msra.mxu0 0.0
    %242 = vmatprep.subr.mxu0 0.0
    %243 = vmatpush2.msra.mxu0 0.0
    %244 = vmatprep.subr.mxu0 0.0
    %245 = vmatpush2.msra.mxu0 0.0
    %246 = vmatprep.subr.mxu0 0.0
    %247 = vmatpush2.msra.mxu0 0.0
    %248 = vmatprep.subr.mxu0 0.0
    %249 = vmatpush2.msra.mxu0 0.0
    %250 = vmatprep.subr.mxu0 0.0
    %251 = vmatpush2.msra.mxu0 0.0
    %252 = vmatprep.subr.mxu0 0.0
    %253 = vmatpush2.msra.mxu0 0.0
    %254 = vmatprep.subr.mxu0 0.0
    %255 = vmatpush2.msra.mxu0 0.0
    %256 = vmatprep.subr.mxu0 0.0
    %257 = vmatpush2.msra.mxu0 0.0
    %258 = vmatprep.subr.mxu0 0.0
    %259 = vmatpush2.msra.mxu0 0.0
    %260 = vmatprep.mubr.f32.mxu0 0.0
    %261 = vmatmul.mubr.f32.gmra.mxu0 %v194
    %v262 = vpop.f32.mrf.mxu0
    %v263 = vadd.f32 %v192, %v262
    %v264 = vpop.f32.mrf.mxu0
    %265 = vdwg.mxu0
    %v266 = vld [vmem:[%s187 + $0x1] sm:$0x1]
    %v267 = vld [vmem:[%s187 + $0x2] sm:$0x1]
    %v268 = vmax.f32 %v263, 0.0
    %vm269 = vcmask 392192
    %v270 = vsel %vm269, %v268, 0.0
    %v271 = vrot.slane %v270, 4
    %v272 = vadd.f32 %v270, %v271
    %v273 = vrot.slane %v272, 2
    %v274 = vadd.f32 %v272, %v273
    %v275 = vrot.slane %v274, 1
    %v276 = vadd.f32 %v274, %v275
    %v277 = vmul.f32 %v276, %v149
    %v278 = vmul.f32 %v268, %v268
    %v279 = vsel %vm269, %v278, 0.0
    %v280 = vrot.slane %v279, 4
    %v281 = vadd.f32 %v279, %v280
    %v282 = vrot.slane %v281, 2
    %v283 = vadd.f32 %v281, %v282
    %v284 = vrot.slane %v283, 1
    %v285 = vadd.f32 %v283, %v284
    %v286 = vmul.f32 %v285, %v149
    %v287 = vmul.f32 %v277, %v277
    %v288 = vsub.f32 %v286, %v287
    %v289 = vmax.f32 %v288, 0.0
    %v290 = vadd.f32 %v289, 1e-05
    %v291 = vrsqrt.pop %v290
    %v292 = vmul.f32 %v266, %v291
    %v293 = vmul.f32 %v277, %v292
    %v294 = vsub.f32 %v267, %v293
    %v295 = vlaneseq
    %v296 = vshrl.u32 %v295, 7
    %v297 = vsub.s32 0, %v296
    %v298 = vrot.slane %v292, %v297
    %v299 = vmul.f32 %v268, %v298
    %v300 = vlaneseq
    %v301 = vshrl.u32 %v300, 7
    %v302 = vsub.s32 0, %v301
    %v303 = vrot.slane %v294, %v302
    %v304 = vadd.f32 %v299, %v303
    %s305 = scalar_lea.vmem [#allocation5], 128
    %v306 = vld [vmem:[%s305] sm:$0xff]
    %v307 = vld [vmem:[%s305 + $0x8] sm:$0xff]
    %v308 = vld [vmem:[%s305 + $0x10] sm:$0xff]
    %v309 = vld [vmem:[%s305 + $0x18] sm:$0xff]
    %v310 = vld [vmem:[%s305 + $0x20] sm:$0xff]
    %v311 = vld [vmem:[%s305 + $0x28] sm:$0xff]
    %s312 = scalar_lea.vmem [#allocation7], 8
    %v313 = vld [vmem:[%s312] sm:$0x1]
    %v314 = vlaneseq
    %v315 = vshrl.u32 %v314, 7
    %v316 = vsub.s32 0, %v315
    %v317 = vrot.slane %v313, %v316
    %v319 = vsel %vm269, %v304, 0
    %321 = vmatprep.subr.mxu0 0.0
    %322 = vmatpush1.msra.mxu0 0.0
    %323 = vmatprep.subr.mxu0 0.0
    %324 = vmatpush1.msra.mxu0 0.0
    %325 = vmatprep.subr.mxu0 0.0
    %326 = vmatpush1.msra.mxu0 0.0
    %327 = vmatprep.subr.mxu0 0.0
    %328 = vmatpush1.msra.mxu0 0.0
    %329 = vmatprep.subr.mxu0 0.0
    %330 = vmatpush1.msra.mxu0 0.0
    %331 = vmatprep.subr.mxu0 0.0
    %332 = vmatpush1.msra.mxu0 0.0
    %333 = vmatprep.subr.mxu0 0.0
    %334 = vmatpush1.msra.mxu0 0.0
    %335 = vmatprep.subr.mxu0 0.0
    %336 = vmatpush1.msra.mxu0 0.0
    %337 = vmatprep.subr.mxu0 0.0
    %338 = vmatpush1.msra.mxu0 0.0
    %339 = vmatprep.subr.mxu0 0.0
    %340 = vmatpush1.msra.mxu0 0.0
    %341 = vmatprep.subr.mxu0 0.0
    %342 = vmatpush1.msra.mxu0 %v311
    %343 = vmatprep.subr.mxu0 0.0
    %344 = vmatpush1.msra.mxu0 %v310
    %345 = vmatprep.subr.mxu0 0.0
    %346 = vmatpush1.msra.mxu0 %v309
    %347 = vmatprep.subr.mxu0 0.0
    %348 = vmatpush1.msra.mxu0 %v308
    %349 = vmatprep.subr.mxu0 0.0
    %350 = vmatpush1.msra.mxu0 %v307
    %351 = vmatprep.subr.mxu0 0.0
    %352 = vmatpush1.msra.mxu0 %v306
    %353 = vmatprep.subr.mxu0 0.0
    %354 = vmatpush2.msra.mxu0 0.0
    %355 = vmatprep.subr.mxu0 0.0
    %356 = vmatpush2.msra.mxu0 0.0
    %357 = vmatprep.subr.mxu0 0.0
    %358 = vmatpush2.msra.mxu0 0.0
    %359 = vmatprep.subr.mxu0 0.0
    %360 = vmatpush2.msra.mxu0 0.0
    %361 = vmatprep.subr.mxu0 0.0
    %362 = vmatpush2.msra.mxu0 0.0
    %363 = vmatprep.subr.mxu0 0.0
    %364 = vmatpush2.msra.mxu0 0.0
    %365 = vmatprep.subr.mxu0 0.0
    %366 = vmatpush2.msra.mxu0 0.0
    %367 = vmatprep.subr.mxu0 0.0
    %368 = vmatpush2.msra.mxu0 0.0
    %369 = vmatprep.subr.mxu0 0.0
    %370 = vmatpush2.msra.mxu0 0.0
    %371 = vmatprep.subr.mxu0 0.0
    %372 = vmatpush2.msra.mxu0 0.0
    %373 = vmatprep.subr.mxu0 0.0
    %374 = vmatpush2.msra.mxu0 0.0
    %375 = vmatprep.subr.mxu0 0.0
    %376 = vmatpush2.msra.mxu0 0.0
    %377 = vmatprep.subr.mxu0 0.0
    %378 = vmatpush2.msra.mxu0 0.0
    %379 = vmatprep.subr.mxu0 0.0
    %380 = vmatpush2.msra.mxu0 0.0
    %381 = vmatprep.subr.mxu0 0.0
    %382 = vmatpush2.msra.mxu0 0.0
    %383 = vmatprep.subr.mxu0 0.0
    %384 = vmatpush2.msra.mxu0 0.0
    %385 = vmatprep.mubr.f32.mxu0 0.0
    %386 = vmatmul.mubr.f32.gmra.mxu0 %v319
    %v387 = vpop.f32.mrf.mxu0
    %v388 = vadd.f32 %v317, %v387
    %v389 = vpop.f32.mrf.mxu0
    %390 = vdwg.mxu0
    %v391 = vxor.u32 %v388, 2147483648
    %v392 = vmul.f32 %v391, 1.442695
    %v393 = vpow.pop %v392
    %v394 = vadd.f32 %v393, 1.0
    %v395 = vrcp.pop %v394
    %v396 = vmul.f32 1.0, %v395
    %vm397 = vcmask 130048
    %398 = vst.msk [vmem:[#allocation8] sm:$0xff] %vm397, %v396
    // Predicated region
    $region26: #{tpu_custom_call.1} parent=1 // pred_check
      _
    $region27: #{tpu_custom_call.1} parent=1 // pred_check_branch
      %400 = sbr.rel (0) target = $region29
    $region28: #{tpu_custom_call.1} parent=1 // pred_region
      %s402 = ssub.s32 128, 128
      %403 = vsyncadd [#allocation4], %s402
      %s405 = sshll.u32 [#allocation8], 4
      %s406 = int_to_ptr.vmem [resolvable:$true] %s405
      %408 = dma.vmem_to_hbm [thread:$0]  %s406, 128, %s3, [#allocation4]
    $region29: #{tpu_custom_call.1} parent=1 // pred_fallthru
      _
    // Predicated region
    $region30: #{tpu_custom_call.1} parent=1 // pred_check
      _
    $region31: #{tpu_custom_call.1} parent=1 // pred_check_branch
      %410 = sbr.rel (0) target = $region33
    $region32: #{tpu_custom_call.1} parent=1 // pred_region
      %411 = dma.done [#allocation4], 128
    $region33: #{tpu_custom_call.1} parent=1 // pred_fallthru
      _
    %412 = vsyncpa [#allocation3], 1
    %413 = vsyncpa [#allocation6], 1
    %414 = vsyncpa [#allocation4], 1

</llo_original>
